<compile_context>
chip_gen: v5e
topology: v5e:2x2
jax: 0.10.0
libtpu: 0.0.40
codegen_flags: <defaults>
</compile_context>

<pallas_src>
import functools

import jax
import jax.numpy as jnp
from jax.experimental import pallas as pl
from jax.experimental.pallas import tpu as pltpu


def _round_up(x: int, m: int) -> int:
    return (x + m - 1) // m * m


# ---------------------------------------------------------------------------
# Fused single-S-tile kernel: score -> softmax -> (attn, context) in one pass.
# ---------------------------------------------------------------------------
def _fused_attn_kernel(q_ref, v_ref, *out_refs, s_valid, mask_cols,
                       matmul_dtype, approx_recip, with_attn):
    if with_attn:
        ctx_ref, attn_ref = out_refs
    else:
        (ctx_ref,) = out_refs

    q = q_ref[...]                                    # [TQ, H]  (matmul dtype)
    v = v_ref[...]                                    # [SP, H]

    # score = q @ v^T, contracting on H (no explicit transpose / XLU).
    s = jax.lax.dot_general(
        q, v, dimension_numbers=(((1,), (1,)), ((), ())),
        preferred_element_type=jnp.float32)           # [TQ, SP]

    if mask_cols:
        # Only emitted when S was padded; every row keeps >= 1 valid column.
        col = jax.lax.broadcasted_iota(jnp.int32, s.shape, 1)
        s = jnp.where(col < s_valid, s, -jnp.inf)

    m = jnp.max(s, axis=-1, keepdims=True)
    p = jnp.exp(s - m)
    inv_l = pl.reciprocal(jnp.sum(p, axis=-1, keepdims=True),
                          approx=approx_recip)
    attn = p * inv_l
    if with_attn:
        attn_ref[...] = attn.astype(attn_ref.dtype)
    ctx_ref[...] = jnp.dot(attn.astype(matmul_dtype), v,
                           preferred_element_type=jnp.float32
                           ).astype(ctx_ref.dtype)


# ---------------------------------------------------------------------------
# Flash-style pass (multi S tile): context + logsumexp with online softmax.
# ---------------------------------------------------------------------------
def _flash_fwd_kernel(q_ref, v_ref, *refs, s_valid, block_s, mask_last,
                      matmul_dtype, approx_recip, with_lse):
    if with_lse:
        ctx_ref, lse_ref, m_sc, l_sc, acc_sc = refs
    else:
        ctx_ref, m_sc, l_sc, acc_sc = refs
        lse_ref = None

    si = pl.program_id(2)
    n_s = pl.num_programs(2)

    @pl.when(si == 0)
    def _init():
        m_sc[...] = jnp.full_like(m_sc, -jnp.inf)
        l_sc[...] = jnp.zeros_like(l_sc)
        acc_sc[...] = jnp.zeros_like(acc_sc)

    q = q_ref[...]                                    # [TQ, H]
    v = v_ref[...]                                    # [TS, H]
    s = jax.lax.dot_general(
        q, v, dimension_numbers=(((1,), (1,)), ((), ())),
        preferred_element_type=jnp.float32)           # [TQ, TS]

    def update(scores):
        # Invariant: every tile has >= 1 unmasked column (pad < block_s by
        # construction), so m_new is always finite and m_prev - m_new never
        # evaluates (-inf) - (-inf).
        m_prev = m_sc[...]
        m_new = jnp.maximum(m_prev, jnp.max(scores, axis=-1, keepdims=True))
        alpha = jnp.exp(m_prev - m_new)
        p = jnp.exp(scores - m_new)                   # [TQ, TS], f32
        l_sc[...] = alpha * l_sc[...] + jnp.sum(p, axis=-1, keepdims=True)
        acc_sc[...] = alpha * acc_sc[...] + jnp.dot(
            p.astype(matmul_dtype), v, preferred_element_type=jnp.float32)
        m_sc[...] = m_new

    if mask_last:
        # The iota + compare + select only runs on the final S tile; all other
        # tiles take the mask-free path (saves ~3 VPU ops / score element).
        @pl.when(si == n_s - 1)
        def _masked():
            col = jax.lax.broadcasted_iota(jnp.int32, s.shape, 1) + si * block_s
            update(jnp.where(col < s_valid, s, -jnp.inf))

        @pl.when(si != n_s - 1)
        def _unmasked():
            update(s)
    else:
        update(s)

    @pl.when(si == n_s - 1)
    def _finalize():
        inv_l = pl.reciprocal(l_sc[...], approx=approx_recip)
        ctx_ref[...] = (acc_sc[...] * inv_l).astype(ctx_ref.dtype)
        if with_lse:
            lse_ref[...] = m_sc[...] + jnp.log(l_sc[...])


# ---------------------------------------------------------------------------
# Optional pass 2 (multi S tile only): lane-dense attention-weight writeback.
# ---------------------------------------------------------------------------
def _attn_probs_kernel(q_ref, v_ref, lse_ref, attn_ref):
    s = jax.lax.dot_general(
        q_ref[...], v_ref[...],
        dimension_numbers=(((1,), (1,)), ((), ())),
        preferred_element_type=jnp.float32)           # [TQ, TS]
    attn_ref[...] = jnp.exp(s - lse_ref[...]).astype(attn_ref.dtype)


def dot_product_attention(query: jax.Array, value: jax.Array,
                          *, block_q: int = 256, block_s: int = 512,
                          need_attn: bool = True,
                          matmul_dtype=jnp.bfloat16):
    """query: [B, Q, H], value: [B, S, H] -> (context [B, Q, H], attn [B, Q, S])."""
    B, Q, H = query.shape
    Bv, S, Hv = value.shape
    assert B == Bv and H == Hv, "query/value batch or hidden dims mismatch"

    out_dtype = query.dtype
    approx_recip = matmul_dtype != jnp.float32

    # Sublane/lane friendly tile sizes (Q tiles -> multiples of 8, S tiles ->
    # multiples of 128).  H stays unpadded (full last block dim).
    block_q = min(block_q, _round_up(Q, 8))
    block_s = min(block_s, _round_up(S, 128))
    qp = _round_up(Q, block_q)
    sp = _round_up(S, block_s)

    # Best-effort: give the v7x megacore (2 TCs) >= 2 independent grid items.
    if B * (qp // block_q) < 2 and block_q > 8:
        block_q = max(8, _round_up(block_q // 2, 8))
        qp = _round_up(Q, block_q)

    # Cast once in the wrapper so the kernel DMAs half the q/v bytes.
    q_in = query if query.dtype == matmul_dtype else query.astype(matmul_dtype)
    v_in = value if value.dtype == matmul_dtype else value.astype(matmul_dtype)
    if qp != Q:
        q_in = jnp.pad(q_in, ((0, 0), (0, qp - Q), (0, 0)))
    if sp != S:
        v_in = jnp.pad(v_in, ((0, 0), (0, sp - S), (0, 0)))

    vmem_limit = 32 * 1024 * 1024

    if sp == block_s:
        # ----- Fused single-pass path (one S tile): no second v read, no
        # second QK^T, no lse tensor. -----
        grid = (B, qp // block_q)
        out_shapes = [jax.ShapeDtypeStruct((B, qp, H), out_dtype)]
        out_specs = [pl.BlockSpec((pl.Squeezed(), block_q, H),
                                  lambda b, qi: (b, qi, 0))]
        if need_attn:
            out_shapes.append(jax.ShapeDtypeStruct((B, qp, sp), out_dtype))
            out_specs.append(pl.BlockSpec((pl.Squeezed(), block_q, sp),
                                          lambda b, qi: (b, qi, 0)))

        outs = pl.pallas_call(
            functools.partial(_fused_attn_kernel, s_valid=S,
                              mask_cols=(sp != S), matmul_dtype=matmul_dtype,
                              approx_recip=approx_recip, with_attn=need_attn),
            grid_spec=pltpu.PrefetchScalarGridSpec(
                num_scalar_prefetch=0,
                grid=grid,
                in_specs=[
                    pl.BlockSpec((pl.Squeezed(), block_q, H),
                                 lambda b, qi: (b, qi, 0)),
                    pl.BlockSpec((pl.Squeezed(), sp, H),
                                 lambda b, qi: (b, 0, 0)),
                ],
                out_specs=out_specs),
            out_shape=tuple(out_shapes),
            compiler_params=pltpu.CompilerParams(
                dimension_semantics=("parallel", "parallel"),
                vmem_limit_bytes=vmem_limit),
        )(q_in, v_in)
        ctx_p = outs[0]
        attn_p = outs[1] if need_attn else None
    else:
        # ----- Flash path: grid (B, Q tiles, S tiles), S innermost. -----
        grid = (B, qp // block_q, sp // block_s)
        mask_last = (sp != S)

        out_shapes = [jax.ShapeDtypeStruct((B, qp, H), out_dtype)]
        out_specs = [pl.BlockSpec((pl.Squeezed(), block_q, H),
                                  lambda b, qi, si: (b, qi, 0))]
        if need_attn:  # lse only materialized when attn is requested
            out_shapes.append(jax.ShapeDtypeStruct((B, qp, 1), jnp.float32))
            out_specs.append(pl.BlockSpec((pl.Squeezed(), block_q, 1),
                                          lambda b, qi, si: (b, qi, 0)))

        outs = pl.pallas_call(
            functools.partial(_flash_fwd_kernel, s_valid=S, block_s=block_s,
                              mask_last=mask_last, matmul_dtype=matmul_dtype,
                              approx_recip=approx_recip, with_lse=need_attn),
            grid_spec=pltpu.PrefetchScalarGridSpec(
                num_scalar_prefetch=0,
                grid=grid,
                in_specs=[
                    pl.BlockSpec((pl.Squeezed(), block_q, H),
                                 lambda b, qi, si: (b, qi, 0)),
                    # Tuning knob: pipeline_mode=pl.Buffered(3) here can hide
                    # v-tile DMA latency for tiny H; sweep per generation.
                    pl.BlockSpec((pl.Squeezed(), block_s, H),
                                 lambda b, qi, si: (b, si, 0)),
                ],
                out_specs=out_specs,
                scratch_shapes=[
                    pltpu.VMEM((block_q, 1), jnp.float32),   # running max m
                    pltpu.VMEM((block_q, 1), jnp.float32),   # running denom l
                    pltpu.VMEM((block_q, H), jnp.float32),   # context accum
                ]),
            out_shape=tuple(out_shapes),
            compiler_params=pltpu.CompilerParams(
                dimension_semantics=("parallel", "parallel", "arbitrary"),
                vmem_limit_bytes=vmem_limit),
        )(q_in, v_in)
        ctx_p = outs[0]

        attn_p = None
        if need_attn:
            lse = outs[1]
            attn_p = pl.pallas_call(
                _attn_probs_kernel,
                grid_spec=pltpu.PrefetchScalarGridSpec(
                    num_scalar_prefetch=0,
                    grid=grid,
                    in_specs=[
                        pl.BlockSpec((pl.Squeezed(), block_q, H),
                                     lambda b, qi, si: (b, qi, 0)),
                        pl.BlockSpec((pl.Squeezed(), block_s, H),
                                     lambda b, qi, si: (b, si, 0)),
                        pl.BlockSpec((pl.Squeezed(), block_q, 1),
                                     lambda b, qi, si: (b, qi, 0)),
                    ],
                    out_specs=pl.BlockSpec((pl.Squeezed(), block_q, block_s),
                                           lambda b, qi, si: (b, qi, si))),
                out_shape=jax.ShapeDtypeStruct((B, qp, sp), out_dtype),
                compiler_params=pltpu.CompilerParams(
                    dimension_semantics=("parallel", "parallel", "parallel"),
                    vmem_limit_bytes=vmem_limit),
            )(q_in, v_in, lse)

    context = ctx_p[:, :Q, :] if qp != Q else ctx_p
    if not need_attn:
        return context, None
    attn = attn_p[:, :Q, :S] if (qp != Q or sp != S) else attn_p
    return context, attn


def _reference(query, value):
    score = jnp.einsum("bqh,bsh->bqs", query, value,
                       precision=jax.lax.Precision.HIGHEST)
    attn = jax.nn.softmax(score, axis=-1)
    context = jnp.einsum("bqs,bsh->bqh", attn, value,
                         precision=jax.lax.Precision.HIGHEST)
    return context, attn


if __name__ == "__main__":
    # Small deterministic shapes consistent with the module's forward pass.
    B, Q, S, H = 2, 8, 16, 32
    key = jax.random.PRNGKey(0)
    kq, kv, kv2 = jax.random.split(key, 3)
    query = jax.random.normal(kq, (B, Q, H), dtype=jnp.float32)
    value = jax.random.normal(kv, (B, S, H), dtype=jnp.float32)

    # 1) Default path: bf16 matmuls, fused single-tile kernel.
    context, attn = dot_product_attention(query, value)
    jax.block_until_ready((context, attn))
    assert context.shape == (B, Q, H) and attn.shape == (B, Q, S)
    # Compare against a reference built from the same bf16-rounded operands
    # (kernel accumulates in f32, so the remaining delta is small).
    q_r = query.astype(jnp.bfloat16).astype(jnp.float32)
    v_r = value.astype(jnp.bfloat16).astype(jnp.float32)
    ref_ctx_b, ref_attn_b = _reference(q_r, v_r)
    assert jnp.allclose(attn, ref_attn_b, atol=2e-2, rtol=2e-2), \
        float(jnp.max(jnp.abs(attn - ref_attn_b)))
    assert jnp.allclose(context, ref_ctx_b, atol=2e-2, rtol=2e-2), \
        float(jnp.max(jnp.abs(context - ref_ctx_b)))

    # 2) Exact-f32 path (fused kernel, exact reciprocal) vs f32 reference.
    ctx32, attn32 = dot_product_attention(query, value,
                                          matmul_dtype=jnp.float32)
    jax.block_until_ready((ctx32, attn32))
    ref_ctx, ref_attn = _reference(query, value)
    assert jnp.allclose(attn32, ref_attn, atol=1e-4, rtol=1e-4), \
        float(jnp.max(jnp.abs(attn32 - ref_attn)))
    assert jnp.allclose(ctx32, ref_ctx, atol=1e-4, rtol=1e-4), \
        float(jnp.max(jnp.abs(ctx32 - ref_ctx)))

    # 3) Flash path (multiple S tiles, masked last tile, attn writeback pass).
    S2 = 200
    value2 = jax.random.normal(kv2, (B, S2, H), dtype=jnp.float32)
    ctx_f, attn_f = dot_product_attention(query, value2, block_s=128,
                                          matmul_dtype=jnp.float32)
    jax.block_until_ready((ctx_f, attn_f))
    ref_ctx_f, ref_attn_f = _reference(query, value2)
    assert ctx_f.shape == (B, Q, H) and attn_f.shape == (B, Q, S2)
    assert jnp.allclose(attn_f, ref_attn_f, atol=1e-4, rtol=1e-4), \
        float(jnp.max(jnp.abs(attn_f - ref_attn_f)))
    assert jnp.allclose(ctx_f, ref_ctx_f, atol=1e-4, rtol=1e-4), \
        float(jnp.max(jnp.abs(ctx_f - ref_ctx_f)))

    print("KERNEL_OK")
</pallas_src>

<mosaic_0001>
module attributes {stable_mosaic.version = 11 : i64} {
  func.func @_fused_attn_kernel(%arg0: i32, %arg1: i32, %arg2: memref<1x8x32xbf16, #tpu.memory_space<vmem>>, %arg3: memref<1x128x32xbf16, #tpu.memory_space<vmem>>, %arg4: memref<1x8x32xf32, #tpu.memory_space<vmem>>, %arg5: memref<1x8x128xf32, #tpu.memory_space<vmem>>) attributes {dimension_semantics = [#tpu.dimension_semantics<parallel>, #tpu.dimension_semantics<parallel>], iteration_bounds = array<i64: 2, 1>, scalar_prefetch = 0 : i64, scratch_operands = 0 : i64, tpu.core_type = #tpu.core_type<tc>, window_params = [{transform_indices = @transform_0, window_bounds = array<i64: 1, 8, 32>}, {transform_indices = @transform_1, window_bounds = array<i64: 1, 128, 32>}, {transform_indices = @transform_2, window_bounds = array<i64: 1, 8, 32>}, {transform_indices = @transform_3, window_bounds = array<i64: 1, 8, 128>}]} {
    %c0 = arith.constant 0 : index
    %c0_0 = arith.constant 0 : index
    %c0_1 = arith.constant 0 : index
    %0 = vector.load %arg2[%c0, %c0_0, %c0_1] : memref<1x8x32xbf16, #tpu.memory_space<vmem>>, vector<1x8x32xbf16>
    %1 = vector.shape_cast %0 : vector<1x8x32xbf16> to vector<8x32xbf16>
    %c0_2 = arith.constant 0 : index
    %c0_3 = arith.constant 0 : index
    %c0_4 = arith.constant 0 : index
    %2 = vector.load %arg3[%c0_2, %c0_3, %c0_4] : memref<1x128x32xbf16, #tpu.memory_space<vmem>>, vector<1x128x32xbf16>
    %3 = vector.shape_cast %2 : vector<1x128x32xbf16> to vector<128x32xbf16>
    %cst = arith.constant dense<0.000000e+00> : vector<8x128xf32>
    %4 = tpu.matmul %1, %3, %cst {dimension_numbers = #tpu.dot_dimension_numbers<[1], [1], [0], [0], [0, 0, 1, 0], [], []>} : vector<8x32xbf16>, vector<128x32xbf16>, vector<8x128xf32> -> vector<8x128xf32>
    %5 = tpu.iota {dimensions = array<i32: 1>} : vector<8x128xi32>
    %c16_i32 = arith.constant 16 : i32
    %6 = vector.broadcast %c16_i32 : i32 to vector<8x128xi32>
    %7 = arith.cmpi slt, %5, %6 : vector<8x128xi32>
    %cst_5 = arith.constant 0xFF800000 : f32
    %8 = vector.broadcast %cst_5 : f32 to vector<8x128xf32>
    %9 = arith.select %7, %4, %8 : vector<8x128xi1>, vector<8x128xf32>
    %cst_6 = arith.constant dense<0xFF800000> : vector<8xf32>
    %10 = vector.multi_reduction <maximumf>, %9, %cst_6 [1] : vector<8x128xf32> to vector<8xf32>
    %11 = vector.shape_cast %10 : vector<8xf32> to vector<8x1xf32>
    %12 = vector.broadcast %11 : vector<8x1xf32> to vector<8x128xf32>
    %13 = arith.subf %9, %12 : vector<8x128xf32>
    %14 = math.exp %13 : vector<8x128xf32>
    %cst_7 = arith.constant dense<0.000000e+00> : vector<8xf32>
    %15 = vector.multi_reduction <add>, %14, %cst_7 [1] : vector<8x128xf32> to vector<8xf32>
    %16 = vector.shape_cast %15 : vector<8xf32> to vector<8x1xf32>
    %17 = tpu.reciprocal %16 {approx = true} : vector<8x1xf32> -> vector<8x1xf32>
    %18 = vector.broadcast %17 : vector<8x1xf32> to vector<8x128xf32>
    %19 = arith.mulf %14, %18 : vector<8x128xf32>
    %c0_8 = arith.constant 0 : index
    %c0_9 = arith.constant 0 : index
    %c0_10 = arith.constant 0 : index
    %20 = vector.load %arg5[%c0_8, %c0_9, %c0_10] : memref<1x8x128xf32, #tpu.memory_space<vmem>>, vector<1x8x128xf32>
    %21 = vector.shape_cast %20 : vector<1x8x128xf32> to vector<8x128xf32>
    %22 = vector.shape_cast %19 : vector<8x128xf32> to vector<1x8x128xf32>
    tpu.vector_store %arg5[%c0_8, %c0_9, %c0_10], %22 {strides = array<i32>} : memref<1x8x128xf32, #tpu.memory_space<vmem>>, vector<1x8x128xf32>,
    %23 = arith.truncf %19 : vector<8x128xf32> to vector<8x128xbf16>
    %cst_11 = arith.constant dense<0.000000e+00> : vector<8x32xf32>
    %24 = tpu.matmul %23, %3, %cst_11 {dimension_numbers = #tpu.dot_dimension_numbers<[1], [0], [0], [1], [0, 0, 1, 1], [], []>} : vector<8x128xbf16>, vector<128x32xbf16>, vector<8x32xf32> -> vector<8x32xf32>
    %c0_12 = arith.constant 0 : index
    %c0_13 = arith.constant 0 : index
    %c0_14 = arith.constant 0 : index
    %25 = vector.load %arg4[%c0_12, %c0_13, %c0_14] : memref<1x8x32xf32, #tpu.memory_space<vmem>>, vector<1x8x32xf32>
    %26 = vector.shape_cast %25 : vector<1x8x32xf32> to vector<8x32xf32>
    %27 = vector.shape_cast %24 : vector<8x32xf32> to vector<1x8x32xf32>
    tpu.vector_store %arg4[%c0_12, %c0_13, %c0_14], %27 {strides = array<i32>} : memref<1x8x32xf32, #tpu.memory_space<vmem>>, vector<1x8x32xf32>,
    return
  }
  func.func @transform_0(%arg0: i32, %arg1: i32) -> (i32, i32, i32) {
    %c0_i32 = arith.constant 0 : i32
    %c0_i32_0 = arith.constant 0 : i32
    return %arg0, %arg1, %c0_i32 : i32, i32, i32
  }
  func.func @transform_1(%arg0: i32, %arg1: i32) -> (i32, i32, i32) {
    %c0_i32 = arith.constant 0 : i32
    %c0_i32_0 = arith.constant 0 : i32
    %c0_i32_1 = arith.constant 0 : i32
    return %arg0, %c0_i32, %c0_i32_0 : i32, i32, i32
  }
  func.func @transform_2(%arg0: i32, %arg1: i32) -> (i32, i32, i32) {
    %c0_i32 = arith.constant 0 : i32
    %c0_i32_0 = arith.constant 0 : i32
    return %arg0, %arg1, %c0_i32 : i32, i32, i32
  }
  func.func @transform_3(%arg0: i32, %arg1: i32) -> (i32, i32, i32) {
    %c0_i32 = arith.constant 0 : i32
    %c0_i32_0 = arith.constant 0 : i32
    return %arg0, %arg1, %c0_i32 : i32, i32, i32
  }
}

</mosaic_0001>

<llo_original>
// kernel: tpu_custom_call.1
$region0: #{tpu_custom_call.1}
  #allocation0 [shape = 'u32[]', space=smem, size = 0x4, offset = 0x4, fixed_abs, tag = 'smem constant byte address 0x4 - core index']
  #allocation1 [shape = 'u32[72,128]{1,0:T(1,128)}', space=vmem, size = 0x9000, scoped, tag = 'internal scratch']
  %s0 = inlined_call_operand.vmem [shape: bf16[2,8,32], index: 0, kind: input, shape index: {}]
  %s1 = inlined_call_operand.vmem [shape: bf16[2,128,32], index: 1, kind: input, shape index: {}]
  %s2 = inlined_call_operand.hbm [shape: f32[2,8,32], index: 2, kind: output, shape index: {0}]
  %s3 = inlined_call_operand.hbm [shape: f32[2,8,128], index: 3, kind: output, shape index: {1}]
  %4 = xla_tuple %s2, %s3
  %s5 = sld [smem:[#allocation0]]
  $region49: #{tpu_custom_call.1} parent=0
    _
  %s7 = ssub.s32 1, %s5
  %s8 = scalar_select 0, %s7, %s5
  $region1: #{tpu_custom_call.1} parent=0
    #allocation2 [shape = 'u8[8192]{0}', space=vmem, size = 0x2000, scoped, tag = 'output window, operand 0']
    #allocation3 [shape = 's32[2]{0}', space=sflag, size = 0x8, scoped, tag = 'scoped memory for tpu_custom_call.1']
    #allocation4 [shape = 'u8[8192]{0}', space=vmem, size = 0x2000, scoped, tag = 'output window, operand 1']
    #allocation5 [shape = 's32[2]{0}', space=sflag, size = 0x8, scoped, tag = 'scoped memory for tpu_custom_call.1']
    %9 = vsyncpa [#allocation3], 0
    %s10 = scalar_lea.sflag [#allocation3], 1
    %11 = vsyncpa %s10, 0
    %12 = vsyncpa [#allocation5], 0
    %s13 = scalar_lea.sflag [#allocation5], 1
    %14 = vsyncpa %s13, 0
    loop: start=0, step=1, limit=4
    $region2: #{tpu_custom_call.1} parent=1 // loop_pre_header
      _
    $region3: #{tpu_custom_call.1} parent=1 // loop_header
      %s16 = sphi 0, %s20
      %p17 = scmp.ge.s32.totalorder %s16, 4
      %s23 = sphi 0, %s35
      %s24 = sphi 0, %s31
      %s25 = sphi 0, %s23
      %s26 = sphi 0, %s24
      %s27 = sphi 0, %s25
      %s28 = sphi 0, %s26
      %s40 = sphi 0, %s42
      %s43 = sphi 0, %s40
      %s44 = sphi 0, %s43
      %s60 = sphi 0, %s44
      %s66 = sphi 0, %s68
      %s69 = sphi 0, %s66
      %s70 = sphi 0, %s69
      %s86 = sphi 0, %s70
      %s94 = sphi 0, %s96
      %s97 = sphi 0, %s94
      %s98 = sphi 0, %s97
      %s114 = sphi 0, %s98
      %s122 = sphi 0, %s124
      %s125 = sphi 0, %s122
      %s126 = sphi 0, %s125
      %s142 = sphi 0, %s126
    $region4: #{tpu_custom_call.1} parent=1 // loop_header_branch
      %19 = sbr.rel (%p17) target = $region8
    $region5: #{tpu_custom_call.1} parent=1 // loop_body
      %s21 = ssub.s32 %s16, 1
      %s22 = ssub.s32 %s16, 2
      %s29 = sadd.s32 1, %s24
      %p30 = scmp.ge.s32.totalorder %s29, 1
      %s31 = scalar_select %p30, 0, %s29
      %s32 = sadd.s32 1, %s23
      %s33 = scalar_select %p30, %s32, %s23
      %p34 = scmp.ge.s32.totalorder %s33, 2
      %s35 = scalar_select %p34, 0, %s33
      %s36 = ssub.s32 %s23, %s35
      %s37 = ssub.s32 %s24, %s31
      %s38 = sor.u32 %s36, %s37
      %p39 = scmp.eq.s32.totalorder %s38, 0
      %s41 = sadd.s32 %s40, 1
      %s42 = scalar_select %p39, %s40, %s41
      %p45 = pneg %p39
      %p46 = scmp.eq.s32.totalorder %s16, 1
      %p47 = por %p45, %p46
      %p48 = scmp.ne.s32.totalorder %s40, %s43
      %p49 = scmp.eq.s32.totalorder %s16, 0
      %p50 = por %p48, %p49
      %p51 = scmp.ne.s32.totalorder %s40, %s43
      %p52 = scmp.eq.s32.totalorder %s21, 1
      %p53 = por %p51, %p52
      %p54 = scmp.ne.s32.totalorder %s43, %s44
      %p55 = scmp.eq.s32.totalorder %s21, 0
      %p56 = por %p54, %p55
      %p57 = scmp.ne.s32.totalorder %s43, %s44
      %p58 = scmp.eq.s32.totalorder %s22, 1
      %p59 = por %p57, %p58
      %p61 = scmp.ne.s32.totalorder %s44, %s60
      %p62 = scmp.eq.s32.totalorder %s22, 0
      %p63 = por %p61, %p62
      %s64 = ssub.s32 %s23, %s35
      %p65 = scmp.eq.s32.totalorder %s64, 0
      %s67 = sadd.s32 %s66, 1
      %s68 = scalar_select %p65, %s66, %s67
      %p71 = pneg %p65
      %p72 = scmp.eq.s32.totalorder %s16, 1
      %p73 = por %p71, %p72
      %p74 = scmp.ne.s32.totalorder %s66, %s69
      %p75 = scmp.eq.s32.totalorder %s16, 0
      %p76 = por %p74, %p75
      %p77 = scmp.ne.s32.totalorder %s66, %s69
      %p78 = scmp.eq.s32.totalorder %s21, 1
      %p79 = por %p77, %p78
      %p80 = scmp.ne.s32.totalorder %s69, %s70
      %p81 = scmp.eq.s32.totalorder %s21, 0
      %p82 = por %p80, %p81
      %p83 = scmp.ne.s32.totalorder %s69, %s70
      %p84 = scmp.eq.s32.totalorder %s22, 1
      %p85 = por %p83, %p84
      %p87 = scmp.ne.s32.totalorder %s70, %s86
      %p88 = scmp.eq.s32.totalorder %s22, 0
      %p89 = por %p87, %p88
      %s90 = ssub.s32 %s23, %s35
      %s91 = ssub.s32 %s24, %s31
      %s92 = sor.u32 %s90, %s91
      %p93 = scmp.eq.s32.totalorder %s92, 0
      %s95 = sadd.s32 %s94, 1
      %s96 = scalar_select %p93, %s94, %s95
      %p99 = pneg %p93
      %p100 = scmp.eq.s32.totalorder %s16, 1
      %p101 = por %p99, %p100
      %p102 = scmp.ne.s32.totalorder %s94, %s97
      %p103 = scmp.eq.s32.totalorder %s16, 0
      %p104 = por %p102, %p103
      %p105 = scmp.ne.s32.totalorder %s94, %s97
      %p106 = scmp.eq.s32.totalorder %s21, 1
      %p107 = por %p105, %p106
      %p108 = scmp.ne.s32.totalorder %s97, %s98
      %p109 = scmp.eq.s32.totalorder %s21, 0
      %p110 = por %p108, %p109
      %p111 = scmp.ne.s32.totalorder %s97, %s98
      %p112 = scmp.eq.s32.totalorder %s22, 1
      %p113 = por %p111, %p112
      %p115 = scmp.ne.s32.totalorder %s98, %s114
      %p116 = scmp.eq.s32.totalorder %s22, 0
      %p117 = por %p115, %p116
      %s118 = ssub.s32 %s23, %s35
      %s119 = ssub.s32 %s24, %s31
      %s120 = sor.u32 %s118, %s119
      %p121 = scmp.eq.s32.totalorder %s120, 0
      %s123 = sadd.s32 %s122, 1
      %s124 = scalar_select %p121, %s122, %s123
      %p127 = pneg %p121
      %p128 = scmp.eq.s32.totalorder %s16, 1
      %p129 = por %p127, %p128
      %p130 = scmp.ne.s32.totalorder %s122, %s125
      %p131 = scmp.eq.s32.totalorder %s16, 0
      %p132 = por %p130, %p131
      %p133 = scmp.ne.s32.totalorder %s122, %s125
      %p134 = scmp.eq.s32.totalorder %s21, 1
      %p135 = por %p133, %p134
      %p136 = scmp.ne.s32.totalorder %s125, %s126
      %p137 = scmp.eq.s32.totalorder %s21, 0
      %p138 = por %p136, %p137
      %p139 = scmp.ne.s32.totalorder %s125, %s126
      %p140 = scmp.eq.s32.totalorder %s22, 1
      %p141 = por %p139, %p140
      %p143 = scmp.ne.s32.totalorder %s126, %s142
      %p144 = scmp.eq.s32.totalorder %s22, 0
      %p145 = por %p143, %p144
      %p146 = scmp.le.s32.totalorder 1, %s16
      %p147 = scmp.lt.s32.totalorder %s16, 3
      %p148 = pnand %p146, %p147
      %p149 = pneg %p148
      // Predicated region
      $region9: #{tpu_custom_call.1} parent=5 // pred_check
        _
      $region10: #{tpu_custom_call.1} parent=5 // pred_check_branch
        %151 = sbr.rel (%p148) target = $region12
      $region11: #{tpu_custom_call.1} parent=5 // pred_region
        %s152 = ssub.s32 %s16, 1
      $region12: #{tpu_custom_call.1} parent=5 // pred_fallthru
        _
      %p153 = scmp.lt.s32.totalorder %s16, 2
      // Predicated region
      $region13: #{tpu_custom_call.1} parent=5 // pred_check
        %p154 = pneg %p153
      $region14: #{tpu_custom_call.1} parent=5 // pred_check_branch
        %156 = sbr.rel (%p154) target = $region16
      $region15: #{tpu_custom_call.1} parent=5 // pred_region
        // Predicated region
        $region17: #{tpu_custom_call.1} parent=15 // pred_check
          %p157 = pneg %p50
        $region18: #{tpu_custom_call.1} parent=15 // pred_check_branch
          %159 = sbr.rel (%p157) target = $region20
        $region19: #{tpu_custom_call.1} parent=15 // pred_region
          %p160 = scmp.lt.s32.totalorder %s23, 1
          %s161 = scalar_select %p160, %s23, 1
          %p162 = scmp.lt.s32.totalorder %s24, 0
          %s163 = scalar_select %p162, %s24, 0
          %s164 = sadd.s32 %s163, %s161
          %s165 = smul.addr %s164, 4
          %s166 = scalar_lea.vmem %s0, %s165
        $region20: #{tpu_custom_call.1} parent=15 // pred_fallthru
          _
        // Predicated region
        $region21: #{tpu_custom_call.1} parent=15 // pred_check
          %p167 = pneg %p76
        $region22: #{tpu_custom_call.1} parent=15 // pred_check_branch
          %169 = sbr.rel (%p167) target = $region24
        $region23: #{tpu_custom_call.1} parent=15 // pred_region
          %p170 = scmp.lt.s32.totalorder %s23, 1
          %s171 = scalar_select %p170, %s23, 1
          %s172 = smul.addr %s171, 16
          %s173 = smul.addr %s172, 4
          %s174 = scalar_lea.vmem %s1, %s173
        $region24: #{tpu_custom_call.1} parent=15 // pred_fallthru
          _
      $region16: #{tpu_custom_call.1} parent=5 // pred_fallthru
        _
      %p175 = scmp.le.s32.totalorder 1, %s16
      %p176 = scmp.lt.s32.totalorder %s16, 3
      %p177 = pnand %p175, %p176
      %p178 = pneg %p177
      // Predicated region
      $region25: #{tpu_custom_call.1} parent=5 // pred_check
        _
      $region26: #{tpu_custom_call.1} parent=5 // pred_check_branch
        %180 = sbr.rel (%p177) target = $region28
      $region27: #{tpu_custom_call.1} parent=5 // pred_region
        %s181 = ssub.s32 %s16, 1
        %p182 = scmp.lt.s32.totalorder %s25, 1
        %s183 = scalar_select %p182, %s25, 1
        %p184 = scmp.lt.s32.totalorder %s26, 0
        %s185 = scalar_select %p184, %s26, 0
        %s186 = sadd.s32 %s185, %s183
        %s187 = smul.addr %s186, 4
        %s188 = scalar_lea.vmem %s0, %s187
        %p189 = pneg %p56
        %p190 = pneg %p53
        %p191 = scmp.lt.s32.totalorder %s25, 1
        %s192 = scalar_select %p191, %s25, 1
        %s193 = smul.addr %s192, 16
        %s194 = smul.addr %s193, 4
        %s195 = scalar_lea.vmem %s1, %s194
        %p196 = pneg %p82
        %p197 = pneg %p79
        %p198 = pneg %p110
        %p199 = pneg %p107
        %s200 = sand.u32 %s97, 1
        %s201 = scalar_lea.sflag [#allocation3], %s200
        %s202 = sand.u32 %s97, 1
        %s203 = smul.addr %s202, 8
        %s204 = scalar_lea.vmem [#allocation2], %s203
        %p205 = pneg %p138
        %p206 = pneg %p135
        %s207 = sand.u32 %s125, 1
        %s208 = scalar_lea.sflag [#allocation5], %s207
        %s209 = sand.u32 %s125, 1
        %s210 = smul.addr %s209, 8
        %s211 = scalar_lea.vmem [#allocation4], %s210
        %p212 = scmp.lt.s32.totalorder %s25, 1
        %s213 = scalar_select %p212, %s25, 1
        %p214 = scmp.lt.s32.totalorder %s26, 0
        %s215 = scalar_select %p214, %s26, 0
        %s216 = sadd.s32 %s215, %s213
        %s217 = smul.addr %s216, 4
        %s218 = scalar_lea.vmem %s0, %s217
        %p219 = scmp.lt.s32.totalorder %s25, 1
        %s220 = scalar_select %p219, %s25, 1
        %s221 = smul.addr %s220, 16
        %s222 = smul.addr %s221, 4
        %s223 = scalar_lea.vmem %s1, %s222
        %v224 = vld [vmem:[%s218] sm:$0xf]
        %v225 = vld [vmem:[%s223] sm:$0xf]
        %v226 = vld [vmem:[%s223 + $0x4] sm:$0xf]
        %v227 = vld [vmem:[%s223 + $0x8] sm:$0xf]
        %v228 = vld [vmem:[%s223 + $0xc] sm:$0xf]
        %v229 = vld [vmem:[%s223 + $0x10] sm:$0xf]
        %v230 = vld [vmem:[%s223 + $0x14] sm:$0xf]
        %v231 = vld [vmem:[%s223 + $0x18] sm:$0xf]
        %v232 = vld [vmem:[%s223 + $0x1c] sm:$0xf]
        %v233 = vld [vmem:[%s223 + $0x20] sm:$0xf]
        %v234 = vld [vmem:[%s223 + $0x24] sm:$0xf]
        %v235 = vld [vmem:[%s223 + $0x28] sm:$0xf]
        %v236 = vld [vmem:[%s223 + $0x2c] sm:$0xf]
        %v237 = vld [vmem:[%s223 + $0x30] sm:$0xf]
        %v238 = vld [vmem:[%s223 + $0x34] sm:$0xf]
        %v239 = vld [vmem:[%s223 + $0x38] sm:$0xf]
        %v240 = vld [vmem:[%s223 + $0x3c] sm:$0xf]
        %v257 = vunpack.c.l.b16 %v225
        %v258 = vunpack.c.l.b16 %v226
        %v259 = vunpack.c.l.b16 %v227
        %v260 = vunpack.c.l.b16 %v228
        %v261 = vunpack.c.l.b16 %v229
        %v262 = vunpack.c.l.b16 %v230
        %v263 = vunpack.c.l.b16 %v231
        %v264 = vunpack.c.l.b16 %v232
        %v265 = vunpack.c.l.b16 %v233
        %v266 = vunpack.c.l.b16 %v234
        %v267 = vunpack.c.l.b16 %v235
        %v268 = vunpack.c.l.b16 %v236
        %v269 = vunpack.c.l.b16 %v237
        %v270 = vunpack.c.l.b16 %v238
        %v271 = vunpack.c.l.b16 %v239
        %v272 = vunpack.c.l.b16 %v240
        %v273 = vpack.c.b16 %v258, %v257
        %v274 = vpack.c.b16 %v260, %v259
        %v275 = vpack.c.b16 %v262, %v261
        %v276 = vpack.c.b16 %v264, %v263
        %v277 = vpack.c.b16 %v266, %v265
        %v278 = vpack.c.b16 %v268, %v267
        %v279 = vpack.c.b16 %v270, %v269
        %v280 = vpack.c.b16 %v272, %v271
        %vm281 = vcmask 261120
        %v283 = vsel %vm281, %v224, 0
        %v286 = vsel %vm281, %v273, 0
        %v289 = vsel %vm281, %v274, 0
        %v292 = vsel %vm281, %v275, 0
        %v295 = vsel %vm281, %v276, 0
        %v298 = vsel %vm281, %v277, 0
        %v301 = vsel %vm281, %v278, 0
        %v304 = vsel %vm281, %v279, 0
        %v307 = vsel %vm281, %v280, 0
        %309 = vmatpush.bf16.xpose.msra.mxu0 %v307
        %310 = vmatpush.bf16.xpose.msra.mxu0 %v304
        %311 = vmatpush.bf16.xpose.msra.mxu0 %v301
        %312 = vmatpush.bf16.xpose.msra.mxu0 %v298
        %313 = vmatpush.bf16.xpose.msra.mxu0 %v295
        %314 = vmatpush.bf16.xpose.msra.mxu0 %v292
        %315 = vmatpush.bf16.xpose.msra.mxu0 %v289
        %316 = vmatpush.bf16.xpose.msra.mxu0 %v286
        %317 = vmatmul.bf16.gmra.mxu0 %v283
        %v318 = vpop.f32.mrf.mxu0
        %v319 = vadd.f32 0.0, %v318
        %v320 = vpop.f32.mrf.mxu0
        %321 = vdwg.mxu0
        %v322 = vlaneseq
        %v323 = vand.u32 %v322, 127
        %vm324 = vcmp.lt.s32.totalorder %v323, 16
        %v325 = vsel %vm324, %v319, -inf
        %326 = vmax.xlane.f32.xlu0 %v325
        %v327 = vpop.xlane.xlu0 %326
        %v328 = vsub.f32 %v325, %v327
        %v329 = vmul.f32 %v328, 1.442695
        %v330 = vpow.pop %v329
        %331 = vadd.xlane.f32.xlu0 %v330
        %v332 = vpop.xlane.xlu0 %331
        %v333 = vrcp.pop %v332
        %v334 = vmul.f32 %v330, %v333
        %335 = vst [vmem:[%s211] sm:$0xff] %v334
        %v336 = vpack.c.bf16 %v334, %v334
        %345 = vmatpush.bf16.msra.mxu0 %v280
        %346 = vmatpush.bf16.msra.mxu0 %v279
        %347 = vmatpush.bf16.msra.mxu0 %v278
        %348 = vmatpush.bf16.msra.mxu0 %v277
        %349 = vmatpush.bf16.msra.mxu0 %v276
        %350 = vmatpush.bf16.msra.mxu0 %v275
        %351 = vmatpush.bf16.msra.mxu0 %v274
        %352 = vmatpush.bf16.msra.mxu0 %v273
        %353 = vmatmul.bf16.gmra.mxu0 %v336
        %v354 = vpop.f32.mrf.mxu0
        %v355 = vadd.f32 0.0, %v354
        %v356 = vpop.f32.mrf.mxu0
        %357 = vdwg.mxu0
        %358 = vst.msk [vmem:[%s204] sm:$0xff] %vm281, %v355
        %s359 = sand.u32 %s97, 1
        %s360 = scalar_lea.sflag [#allocation3], %s359
        %s361 = sand.u32 %s97, 1
        %s362 = smul.addr %s361, 8
        %s363 = scalar_lea.vmem [#allocation2], %s362
        %s364 = sand.u32 %s125, 1
        %s365 = scalar_lea.sflag [#allocation5], %s364
        %s366 = sand.u32 %s125, 1
        %s367 = smul.addr %s366, 8
        %s368 = scalar_lea.vmem [#allocation4], %s367
        // Predicated region
        $region29: #{tpu_custom_call.1} parent=27 // pred_check
          %p369 = pneg %p107
        $region30: #{tpu_custom_call.1} parent=27 // pred_check_branch
          %371 = sbr.rel (%p369) target = $region32
        $region31: #{tpu_custom_call.1} parent=27 // pred_region
          %373 = vsyncadd %s360, 0
          %s374 = sadd.s32 %s26, %s25
          %s375 = smul.addr %s374, 8
          %s376 = scalar_lea.hbm %s2, %s375
          %s378 = sshll.u32 %s363, 4
          %s379 = int_to_ptr.vmem [resolvable:$true] %s378
          %s380 = sshll.u32 %s376, 4
          %s381 = int_to_ptr.hbm [resolvable:$true] %s380
          %383 = dma.vmem_to_hbm [thread:$0]  %s379, 128, %s381, %s360
        $region32: #{tpu_custom_call.1} parent=27 // pred_fallthru
          _
        // Predicated region
        $region33: #{tpu_custom_call.1} parent=27 // pred_check
          %p384 = pneg %p135
        $region34: #{tpu_custom_call.1} parent=27 // pred_check_branch
          %386 = sbr.rel (%p384) target = $region36
        $region35: #{tpu_custom_call.1} parent=27 // pred_region
          %388 = vsyncadd %s365, 0
          %s389 = sadd.s32 %s26, %s25
          %s390 = smul.addr %s389, 8
          %s391 = scalar_lea.hbm %s3, %s390
          %s393 = sshll.u32 %s368, 4
          %s394 = int_to_ptr.vmem [resolvable:$true] %s393
          %s395 = sshll.u32 %s391, 4
          %s396 = int_to_ptr.hbm [resolvable:$true] %s395
          %398 = dma.vmem_to_hbm [thread:$0]  %s394, 128, %s396, %s365
        $region36: #{tpu_custom_call.1} parent=27 // pred_fallthru
          _
      $region28: #{tpu_custom_call.1} parent=5 // pred_fallthru
        _
      %p399 = scmp.le.s32.totalorder 2, %s16
      // Predicated region
      $region37: #{tpu_custom_call.1} parent=5 // pred_check
        %p400 = pneg %p399
      $region38: #{tpu_custom_call.1} parent=5 // pred_check_branch
        %402 = sbr.rel (%p400) target = $region40
      $region39: #{tpu_custom_call.1} parent=5 // pred_region
        %s403 = ssub.s32 %s16, 2
        // Predicated region
        $region41: #{tpu_custom_call.1} parent=39 // pred_check
          %p404 = pneg %p113
        $region42: #{tpu_custom_call.1} parent=39 // pred_check_branch
          %406 = sbr.rel (%p404) target = $region44
        $region43: #{tpu_custom_call.1} parent=39 // pred_region
          %s407 = sand.u32 %s98, 1
          %s408 = scalar_lea.sflag [#allocation3], %s407
          %s409 = sand.u32 %s98, 1
          %s410 = smul.addr %s409, 8
          %s411 = scalar_lea.vmem [#allocation2], %s410
          %413 = dma.done %s408, 128
        $region44: #{tpu_custom_call.1} parent=39 // pred_fallthru
          _
        // Predicated region
        $region45: #{tpu_custom_call.1} parent=39 // pred_check
          %p414 = pneg %p141
        $region46: #{tpu_custom_call.1} parent=39 // pred_check_branch
          %416 = sbr.rel (%p414) target = $region48
        $region47: #{tpu_custom_call.1} parent=39 // pred_region
          %s417 = sand.u32 %s126, 1
          %s418 = scalar_lea.sflag [#allocation5], %s417
          %s419 = sand.u32 %s126, 1
          %s420 = smul.addr %s419, 8
          %s421 = scalar_lea.vmem [#allocation4], %s420
          %423 = dma.done %s418, 128
        $region48: #{tpu_custom_call.1} parent=39 // pred_fallthru
          _
      $region40: #{tpu_custom_call.1} parent=5 // pred_fallthru
        _
    $region6: #{tpu_custom_call.1} parent=1 // loop_footer
      %s20 = sadd.s32 1, %s16
    $region7: #{tpu_custom_call.1} parent=1 // loop_footer_branch
      %15 = sbr.rel target = $region3
    $region8: #{tpu_custom_call.1} parent=1 // loop_exit
      _
    %424 = vsyncpa [#allocation3], 1
    %s425 = scalar_lea.sflag [#allocation3], 1
    %426 = vsyncpa %s425, 1
    %427 = vsyncpa [#allocation5], 1
    %s428 = scalar_lea.sflag [#allocation5], 1
    %429 = vsyncpa %s428, 1

</llo_original>
